<compile_context>
chip_gen: v7x
topology: tpu7x:2x2x1
jax: 0.10.0
libtpu: 0.0.40
codegen_flags: <defaults>
</compile_context>

<pallas_src>
import functools

import jax
import jax.numpy as jnp
from jax.experimental import pallas as pl
from jax.experimental.pallas import tpu as pltpu


def _round_up(x, m):
    return (x + m - 1) // m * m


def _siamese_kernel(ids_ref, emb_hbm, w_ref, b_ref, o_ref, x_buf, sem, *, seq_len):
    """Single grid step: fused gather -> dense -> tanh -> per-example mean.

    ids_ref : SMEM [R]      int32  token ids, rows ordered (branch, batch, seq)
    emb_hbm : HBM  [V, D]   f32    embedding table (memory_space=pl.ANY)
    w_ref   : VMEM [D, H]   bf16   shared dense weight
    b_ref   : VMEM [1, H]   f32    shared dense bias
    o_ref   : VMEM [2B, H]  f32    mean-pooled hidden state, branch-major
    x_buf   : VMEM [R, D]   f32    scratch for gathered embedding rows
    sem     : DMA semaphore (1,)
    """
    n_rows = x_buf.shape[0]
    n_ex = o_ref.shape[0]
    seq_pad = n_rows // n_ex

    # ---- fused embedding gather: one small row DMA per token (HBM -> VMEM).
    # Issue everything first, then drain, so the copies overlap each other.
    @pl.loop(0, n_rows)
    def _issue(r):
        tok = ids_ref[r]
        pltpu.make_async_copy(
            emb_hbm.at[pl.ds(tok, 1), :], x_buf.at[pl.ds(r, 1), :], sem.at[0]
        ).start()

    @pl.loop(0, n_rows)
    def _drain(r):
        tok = ids_ref[r]
        pltpu.make_async_copy(
            emb_hbm.at[pl.ds(tok, 1), :], x_buf.at[pl.ds(r, 1), :], sem.at[0]
        ).wait()

    # ---- shared dense + tanh: bf16 MXU operands, f32 accumulation.
    # Bias-add / tanh stay f32 (v5e has no bf16 VPU/EUP path).
    # TODO(synk): per-generation switch to a bf16 tanh path on v6e/v7x.
    x = x_buf[...].astype(jnp.bfloat16)
    h = jnp.dot(x, w_ref[...], preferred_element_type=jnp.float32)
    h = jnp.tanh(h + b_ref[...])

    # ---- per-example mean over the sequence axis: reshape (sublane-aligned,
    # seq_pad is a multiple of 8) + cross-sublane XLU sum. No pool matrix,
    # no extra HBM traffic, MXU left alone.
    h = h.reshape(n_ex, seq_pad, h.shape[-1])
    if seq_pad != seq_len:  # static check: only when S was padded to a sublane multiple
        pos = jax.lax.broadcasted_iota(jnp.int32, (n_ex, seq_pad, 1), 1)
        h = jnp.where(pos < seq_len, h, 0.0)
    o_ref[...] = (jnp.sum(h, axis=1) * (1.0 / seq_len)).astype(o_ref.dtype)


@jax.jit
def siamese_forward(ids1, ids2, embedding, w, b):
    """ids1, ids2: [B, S] int32 token ids. Returns (out1, out2): [B, H] f32."""
    B, S = ids1.shape
    V, D = embedding.shape
    H = w.shape[1]
    Sp = _round_up(S, 8)      # sublane multiple so the in-kernel reshape is free
    n_ex = 2 * B              # both branches share weights; branch-major rows
    R = n_ex * Sp

    # Wrapper-side layout plumbing only (kernel never relayouts): flatten ids
    # as (branch, batch, seq); padded seq slots point at token 0 and are
    # masked out inside the kernel before the mean.
    ids = jnp.stack([ids1, ids2], axis=0).astype(jnp.int32)          # [2, B, S]
    ids = jnp.pad(ids, ((0, 0), (0, 0), (0, Sp - S))).reshape(R)     # [R]

    wp = w.astype(jnp.bfloat16)                # bf16 MXU operand (f32 accumulate)
    bp = b.reshape(1, H).astype(jnp.float32)

    cost = pl.CostEstimate(
        flops=2 * R * D * H + n_ex * Sp * H,
        transcendentals=R * H,
        bytes_accessed=R * 4 + R * D * 4 + D * H * 2 + H * 4 + n_ex * H * 4,
    )

    grid_spec = pltpu.PrefetchScalarGridSpec(
        num_scalar_prefetch=1,                 # token ids land in SMEM
        grid=(1,),                             # single step: one tall matmul
        in_specs=[
            pl.BlockSpec(memory_space=pl.ANY),                 # embedding table (HBM)
            pl.BlockSpec((D, H), lambda i, _ids: (0, 0)),      # shared weight
            pl.BlockSpec((1, H), lambda i, _ids: (0, 0)),      # shared bias
        ],
        out_specs=pl.BlockSpec((n_ex, H), lambda i, _ids: (0, 0)),
        scratch_shapes=[
            pltpu.VMEM((R, D), jnp.float32),                   # gathered embedding rows
            pltpu.SemaphoreType.DMA((1,)),
        ],
    )

    out = pl.pallas_call(
        functools.partial(_siamese_kernel, seq_len=S),
        grid_spec=grid_spec,
        out_shape=jax.ShapeDtypeStruct((n_ex, H), jnp.float32),
        compiler_params=pltpu.CompilerParams(
            dimension_semantics=("arbitrary",),
        ),
        cost_estimate=cost,
    )(ids, embedding.astype(jnp.float32), wp, bp)

    # branch-major rows: first B = branch 1, next B = branch 2
    return out[:B], out[B:]


class SiameseNetworkPallas:
    """Mirrors SiameseNetwork.forward: (mean-pooled emb1, emb2) with shared weights."""

    def __init__(self, vocab_size=64, d_model=32, hidden=32, key=None):
        key = jax.random.PRNGKey(0) if key is None else key
        k_emb, k_w, k_b = jax.random.split(key, 3)
        # deterministic synthetic "base model" parameters
        self.embedding = (
            jax.random.normal(k_emb, (vocab_size, d_model), jnp.float32) * 0.02
        )
        self.w = jax.random.normal(k_w, (d_model, hidden), jnp.float32) * 0.1
        self.b = jax.random.normal(k_b, (hidden,), jnp.float32) * 0.01

    def __call__(self, inputs1, inputs2):
        # attention_mask intentionally unused: the reference module means over
        # all tokens of the last hidden state.
        return siamese_forward(
            inputs1["input_ids"], inputs2["input_ids"],
            self.embedding, self.w, self.b,
        )


if __name__ == "__main__":
    B, S, D, H, V = 2, 8, 32, 32, 64
    key = jax.random.PRNGKey(0)
    k1, k2, kp = jax.random.split(key, 3)

    inputs1 = {
        "input_ids": jax.random.randint(k1, (B, S), 0, V),
        "attention_mask": jnp.ones((B, S), jnp.int32),  # unused by the pool
    }
    inputs2 = {
        "input_ids": jax.random.randint(k2, (B, S), 0, V),
        "attention_mask": jnp.ones((B, S), jnp.int32),
    }

    model = SiameseNetworkPallas(vocab_size=V, d_model=D, hidden=H, key=kp)
    out1, out2 = model(inputs1, inputs2)
    jax.block_until_ready((out1, out2))

    # reference check in plain JAX (f32, same math as the PyTorch module)
    def ref_branch(ids):
        x = model.embedding[ids]
        h = jnp.tanh(x @ model.w + model.b)
        return jnp.mean(h, axis=1)

    r1 = ref_branch(inputs1["input_ids"])
    r2 = ref_branch(inputs2["input_ids"])
    assert out1.shape == (B, H) and out2.shape == (B, H)
    # bf16 MXU operands (f32 accumulate) -> slightly looser tolerance than pure f32
    assert jnp.allclose(out1, r1, atol=5e-3, rtol=5e-2), "branch 1 mismatch"
    assert jnp.allclose(out2, r2, atol=5e-3, rtol=5e-2), "branch 2 mismatch"

    print("KERNEL_OK")
</pallas_src>

<mosaic_0001>
module attributes {stable_mosaic.version = 11 : i64} {
  func.func @_siamese_kernel(%arg0: i32, %arg1: memref<32xi32, #tpu.memory_space<smem>>, %arg2: memref<64x32xf32, #tpu.memory_space<any>>, %arg3: memref<32x32xbf16, #tpu.memory_space<vmem>>, %arg4: memref<1x32xf32, #tpu.memory_space<vmem>>, %arg5: memref<4x32xf32, #tpu.memory_space<vmem>>, %arg6: memref<32x32xf32, #tpu.memory_space<vmem>>, %arg7: memref<1x!tpu.dma_semaphore, #tpu.memory_space<semaphore_mem>>) attributes {dimension_semantics = [#tpu.dimension_semantics<arbitrary>], iteration_bounds = array<i64: 1>, scalar_prefetch = 1 : i64, scratch_operands = 2 : i64, tpu.core_type = #tpu.core_type<tc>, window_params = [{}, {pipeline_mode = #tpu.pipeline_mode<synchronous>, transform_indices = @transform_1, window_bounds = array<i64: 32, 32>}, {pipeline_mode = #tpu.pipeline_mode<synchronous>, transform_indices = @transform_2, window_bounds = array<i64: 1, 32>}, {pipeline_mode = #tpu.pipeline_mode<synchronous>, transform_indices = @transform_3, window_bounds = array<i64: 4, 32>}]} {
    %c0_i32 = arith.constant 0 : i32
    %c32_i32 = arith.constant 32 : i32
    %0 = arith.addi %c0_i32, %c32_i32 : i32
    %c1_i32 = arith.constant 1 : i32
    scf.for %arg8 = %c0_i32 to %0 step %c1_i32  : i32 {
      %c1_i32_14 = arith.constant 1 : i32
      %15 = arith.muli %arg8, %c1_i32_14 : i32
      %c0_i32_15 = arith.constant 0 : i32
      %16 = arith.addi %c0_i32_15, %15 : i32
      %17 = arith.index_cast %16 : i32 to index
      %18 = memref.load %arg1[%17] : memref<32xi32, #tpu.memory_space<smem>>
      %c0_i32_16 = arith.constant 0 : i32
      %c0_i32_17 = arith.constant 0 : i32
      %19 = tpu.memref_slice %arg2[%18, %c0_i32_17] : memref<64x32xf32, #tpu.memory_space<any>> -> memref<1x32xf32, #tpu.memory_space<any>>
      %c0_i32_18 = arith.constant 0 : i32
      %20 = tpu.memref_slice %arg6[%16, %c0_i32_18] : memref<32x32xf32, #tpu.memory_space<vmem>> -> memref<1x32xf32, #tpu.memory_space<vmem>>
      %21 = tpu.memref_slice %arg7[%c0_i32_16] : memref<1x!tpu.dma_semaphore, #tpu.memory_space<semaphore_mem>> -> memref<1x!tpu.dma_semaphore, #tpu.memory_space<semaphore_mem>>
      %22 = tpu.memref_squeeze %21 : memref<1x!tpu.dma_semaphore, #tpu.memory_space<semaphore_mem>> -> memref<!tpu.dma_semaphore, #tpu.memory_space<semaphore_mem>>
      tpu.enqueue_dma source(%19 : memref<1x32xf32, #tpu.memory_space<any>>) target(%20 : memref<1x32xf32, #tpu.memory_space<vmem>>) target_semaphore(%22 : memref<!tpu.dma_semaphore, #tpu.memory_space<semaphore_mem>>)
    }
    %c32_i32_0 = arith.constant 32 : i32
    %c0_i32_1 = arith.constant 0 : i32
    %c32_i32_2 = arith.constant 32 : i32
    %1 = arith.addi %c0_i32_1, %c32_i32_2 : i32
    %c1_i32_3 = arith.constant 1 : i32
    scf.for %arg8 = %c0_i32_1 to %1 step %c1_i32_3  : i32 {
      %c1_i32_14 = arith.constant 1 : i32
      %15 = arith.muli %arg8, %c1_i32_14 : i32
      %c0_i32_15 = arith.constant 0 : i32
      %16 = arith.addi %c0_i32_15, %15 : i32
      %17 = arith.index_cast %16 : i32 to index
      %18 = memref.load %arg1[%17] : memref<32xi32, #tpu.memory_space<smem>>
      %c0_i32_16 = arith.constant 0 : i32
      %c0_i32_17 = arith.constant 0 : i32
      %19 = tpu.memref_slice %arg2[%18, %c0_i32_17] : memref<64x32xf32, #tpu.memory_space<any>> -> memref<1x32xf32, #tpu.memory_space<any>>
      %c0_i32_18 = arith.constant 0 : i32
      %20 = tpu.memref_slice %arg6[%16, %c0_i32_18] : memref<32x32xf32, #tpu.memory_space<vmem>> -> memref<1x32xf32, #tpu.memory_space<vmem>>
      %21 = tpu.memref_slice %arg7[%c0_i32_16] : memref<1x!tpu.dma_semaphore, #tpu.memory_space<semaphore_mem>> -> memref<1x!tpu.dma_semaphore, #tpu.memory_space<semaphore_mem>>
      %22 = tpu.memref_squeeze %21 : memref<1x!tpu.dma_semaphore, #tpu.memory_space<semaphore_mem>> -> memref<!tpu.dma_semaphore, #tpu.memory_space<semaphore_mem>>
      tpu.wait_dma2 semaphore(%22 : memref<!tpu.dma_semaphore, #tpu.memory_space<semaphore_mem>>) src(%19 : memref<1x32xf32, #tpu.memory_space<any>>) dst(%20 : memref<1x32xf32, #tpu.memory_space<vmem>>)
    }
    %c32_i32_4 = arith.constant 32 : i32
    %c0 = arith.constant 0 : index
    %c0_5 = arith.constant 0 : index
    %2 = vector.load %arg6[%c0, %c0_5] : memref<32x32xf32, #tpu.memory_space<vmem>>, vector<32x32xf32>
    %3 = arith.truncf %2 : vector<32x32xf32> to vector<32x32xbf16>
    %c0_6 = arith.constant 0 : index
    %c0_7 = arith.constant 0 : index
    %4 = vector.load %arg3[%c0_6, %c0_7] : memref<32x32xbf16, #tpu.memory_space<vmem>>, vector<32x32xbf16>
    %cst = arith.constant dense<0.000000e+00> : vector<32x32xf32>
    %5 = tpu.matmul %3, %4, %cst {dimension_numbers = #tpu.dot_dimension_numbers<[1], [0], [0], [1], [0, 0, 1, 1], [], []>} : vector<32x32xbf16>, vector<32x32xbf16>, vector<32x32xf32> -> vector<32x32xf32>
    %c0_8 = arith.constant 0 : index
    %c0_9 = arith.constant 0 : index
    %6 = vector.load %arg4[%c0_8, %c0_9] : memref<1x32xf32, #tpu.memory_space<vmem>>, vector<1x32xf32>
    %7 = vector.broadcast %6 : vector<1x32xf32> to vector<32x32xf32>
    %8 = arith.addf %5, %7 : vector<32x32xf32>
    %9 = math.tanh %8 : vector<32x32xf32>
    %10 = vector.shape_cast %9 : vector<32x32xf32> to vector<4x8x32xf32>
    %cst_10 = arith.constant dense<0.000000e+00> : vector<4x32xf32>
    %11 = vector.multi_reduction <add>, %10, %cst_10 [1] : vector<4x8x32xf32> to vector<4x32xf32>
    %cst_11 = arith.constant 1.250000e-01 : f32
    %12 = vector.broadcast %cst_11 : f32 to vector<4x32xf32>
    %13 = arith.mulf %11, %12 : vector<4x32xf32>
    %c0_12 = arith.constant 0 : index
    %c0_13 = arith.constant 0 : index
    %14 = vector.load %arg5[%c0_12, %c0_13] : memref<4x32xf32, #tpu.memory_space<vmem>>, vector<4x32xf32>
    tpu.vector_store %arg5[%c0_12, %c0_13], %13 {strides = array<i32>} : memref<4x32xf32, #tpu.memory_space<vmem>>, vector<4x32xf32>,
    return
  }
  func.func @transform_1(%arg0: i32, %arg1: memref<32xi32, #tpu.memory_space<smem>>) -> (i32, i32) {
    %c0_i32 = arith.constant 0 : i32
    %c0_i32_0 = arith.constant 0 : i32
    %c0_i32_1 = arith.constant 0 : i32
    return %c0_i32, %c0_i32_0 : i32, i32
  }
  func.func @transform_2(%arg0: i32, %arg1: memref<32xi32, #tpu.memory_space<smem>>) -> (i32, i32) {
    %c0_i32 = arith.constant 0 : i32
    %c0_i32_0 = arith.constant 0 : i32
    %c0_i32_1 = arith.constant 0 : i32
    return %c0_i32, %c0_i32_0 : i32, i32
  }
  func.func @transform_3(%arg0: i32, %arg1: memref<32xi32, #tpu.memory_space<smem>>) -> (i32, i32) {
    %c0_i32 = arith.constant 0 : i32
    %c0_i32_0 = arith.constant 0 : i32
    %c0_i32_1 = arith.constant 0 : i32
    return %c0_i32, %c0_i32_0 : i32, i32
  }
}

</mosaic_0001>

<llo_original>
// kernel: siamese_forward.1
$region0: #{siamese_forward.1}
  #allocation0 [shape = 'u32[]', space=smem, size = 0x4, offset = 0x4, fixed_abs, tag = 'smem constant byte address 0x4 - core index']
  #allocation1 [shape = 'u32[144,128]{1,0:T(1,128)}', space=vmem, size = 0x12000, scoped, tag = 'internal scratch']
  #allocation2 [shape = 'f32[32,32]{1,0:T(8,128)}', space=vmem, size = 0x4000, scoped, tag = 'scratch operand']
  #allocation3 [shape = 's32[1]{0}', space=sflag, size = 0x4, scoped, tag = 'scratch operand']
  #allocation4 [shape = 's32[1]{0}', space=sflag, size = 0x4, scoped, tag = 'scoped memory for siamese_forward.1']
  #allocation5 [shape = 'u8[512]{0}', space=smem, size = 0x200, scoped, tag = 'prefetched SMEM operand 0']
  #allocation6 [shape = 's32[]', space=sflag, size = 0x4, offset = 0, fixed_abs, tag = 'sflag constant byte address 0x0 - dummy sync flag']
  %s0 = inlined_call_operand.vmem [shape: s32[32], index: 0, kind: input, shape index: {}]
  %s1 = inlined_call_operand.vmem [shape: f32[64,32], index: 1, kind: input, shape index: {}]
  %s2 = inlined_call_operand.vmem [shape: bf16[32,32], index: 2, kind: input, shape index: {}]
  %s3 = inlined_call_operand.vmem [shape: f32[1,32], index: 3, kind: input, shape index: {}]
  %s4 = inlined_call_operand.vmem [shape: f32[4,32], index: 4, kind: output, shape index: {}]
  %s5 = sld [smem:[#allocation0]]
  $region62: #{siamese_forward.1} parent=0
    _
  %s7 = ssub.s32 1, %s5
  %s8 = scalar_select 0, %s7, %s5
  %s9 = sshll.u32 %s0, 4
  %s10 = int_to_ptr.vmem [resolvable:$true] %s9
  %12 = dma.vmem_to_smem %s10, 16, [#allocation5], [#allocation4]
  %13 = dma.done [#allocation4], 16
  %14 = sfence
  // Predicated region
  $region2: #{siamese_forward.1} parent=0 // pred_check
    _
  $region3: #{siamese_forward.1} parent=0 // pred_check_branch
    %16 = sbr.rel (0) target = $region5
  $region4: #{siamese_forward.1} parent=0 // pred_region
    _
  $region5: #{siamese_forward.1} parent=0 // pred_fallthru
    _
  // Predicated region
  $region6: #{siamese_forward.1} parent=0 // pred_check
    _
  $region7: #{siamese_forward.1} parent=0 // pred_check_branch
    %18 = sbr.rel (0) target = $region9
  $region8: #{siamese_forward.1} parent=0 // pred_region
    _
  $region9: #{siamese_forward.1} parent=0 // pred_fallthru
    _
  loop: start=0, step=1, limit=32
  $region10: #{siamese_forward.1} parent=0 // loop_pre_header
    _
  $region11: #{siamese_forward.1} parent=0 // loop_header
    %s21 = sphi 0, %s25
    %p22 = scmp.ge.s32.totalorder %s21, 32
  $region12: #{siamese_forward.1} parent=0 // loop_header_branch
    %24 = sbr.rel (%p22) target = $region16
  $region13: #{siamese_forward.1} parent=0 // loop_body
    %s26 = sld [smem:[#allocation5 + %s21]]
    %s27 = scalar_lea.vmem %s1, %s26
    %s28 = scalar_lea.vmem [#allocation2], %s21
    %p30 = scmp.lt.u32.totalorder 1, 8
    %p31 = pneg %p30
    // Predicated region
    $region17: #{siamese_forward.1} parent=13 // pred_check
      _
    $region18: #{siamese_forward.1} parent=13 // pred_check_branch
      %33 = sbr.rel (%p30) target = $region20
    $region19: #{siamese_forward.1} parent=13 // pred_region
      %s48 = sand.u32 1, 7
      %p49 = scmp.eq.s32.totalorder %s48, 0
      %p50 = pneg %p49
      // Predicated region
      $region32: #{siamese_forward.1} parent=19 // pred_check
        _
      $region33: #{siamese_forward.1} parent=19 // pred_check_branch
        %52 = sbr.rel (%p49) target = $region35
      $region34: #{siamese_forward.1} parent=19 // pred_region
        %s53 = sand.u32 1, 7
        %s54 = ssub.s32 1, %s53
        %s55 = scalar_lea.vmem %s27, %s54
        %s56 = ssub.s32 1, %s53
        %s57 = scalar_lea.vmem %s28, %s56 [#allocation2]
        %s58 = sshllo.u32 0, %s53
        loop: start=0, step=1, limit=1
        $region36: #{siamese_forward.1} parent=34 // loop_pre_header
          _
        $region37: #{siamese_forward.1} parent=34 // loop_header
          %s60 = sphi 0, %s64
          %p61 = scmp.ge.s32.totalorder %s60, 1
          %s65 = sphi %s55, %s55
          %s66 = sphi %s57, %s57
        $region38: #{siamese_forward.1} parent=34 // loop_header_branch
          %63 = sbr.rel (%p61) target = $region42
        $region39: #{siamese_forward.1} parent=34 // loop_body
          %v67 = vld [vmem:[%s65] sm:%s58]
          %68 = vst [vmem:[%s66] sm:%s58] %v67
        $region40: #{siamese_forward.1} parent=34 // loop_footer
          %s64 = sadd.s32 1, %s60
        $region41: #{siamese_forward.1} parent=34 // loop_footer_branch
          %59 = sbr.rel target = $region37
        $region42: #{siamese_forward.1} parent=34 // loop_exit
          _
      $region35: #{siamese_forward.1} parent=19 // pred_fallthru
        _
    $region20: #{siamese_forward.1} parent=13 // pred_fallthru
      _
    // Predicated region
    $region21: #{siamese_forward.1} parent=13 // pred_check
      %p34 = pneg %p30
    $region22: #{siamese_forward.1} parent=13 // pred_check_branch
      %36 = sbr.rel (%p34) target = $region24
    $region23: #{siamese_forward.1} parent=13 // pred_region
      %s37 = sshllo.u32 0, 1
      loop: start=0, step=1, limit=1
      $region25: #{siamese_forward.1} parent=23 // loop_pre_header
        _
      $region26: #{siamese_forward.1} parent=23 // loop_header
        %s39 = sphi 0, %s43
        %p40 = scmp.ge.s32.totalorder %s39, 1
        %s44 = sphi %s27, %s27
        %s45 = sphi %s28, %s28
      $region27: #{siamese_forward.1} parent=23 // loop_header_branch
        %42 = sbr.rel (%p40) target = $region31
      $region28: #{siamese_forward.1} parent=23 // loop_body
        %v46 = vld [vmem:[%s44] sm:%s37]
        %47 = vst [vmem:[%s45] sm:%s37] %v46
      $region29: #{siamese_forward.1} parent=23 // loop_footer
        %s43 = sadd.s32 1, %s39
      $region30: #{siamese_forward.1} parent=23 // loop_footer_branch
        %38 = sbr.rel target = $region26
      $region31: #{siamese_forward.1} parent=23 // loop_exit
        _
    $region24: #{siamese_forward.1} parent=13 // pred_fallthru
      _
    // Predicated region
    $region43: #{siamese_forward.1} parent=13 // pred_check
      _
    $region44: #{siamese_forward.1} parent=13 // pred_check_branch
      %71 = sbr.rel (0) target = $region46
    $region45: #{siamese_forward.1} parent=13 // pred_region
      %72 = vsyncadd [#allocation3], 16
    $region46: #{siamese_forward.1} parent=13 // pred_fallthru
      _
  $region14: #{siamese_forward.1} parent=0 // loop_footer
    %s25 = sadd.s32 1, %s21
  $region15: #{siamese_forward.1} parent=0 // loop_footer_branch
    %20 = sbr.rel target = $region11
  $region16: #{siamese_forward.1} parent=0 // loop_exit
    _
  loop: start=0, step=1, limit=32
  $region47: #{siamese_forward.1} parent=0 // loop_pre_header
    _
  $region48: #{siamese_forward.1} parent=0 // loop_header
    %s74 = sphi 0, %s78
    %p75 = scmp.ge.s32.totalorder %s74, 32
  $region49: #{siamese_forward.1} parent=0 // loop_header_branch
    %77 = sbr.rel (%p75) target = $region53
  $region50: #{siamese_forward.1} parent=0 // loop_body
    %s79 = sld [smem:[#allocation5 + %s74]]
    %s80 = smul.u32 1, 1
    %s81 = sshll.u32 %s80, 4
    %82 = dma.done [#allocation3], %s81
  $region51: #{siamese_forward.1} parent=0 // loop_footer
    %s78 = sadd.s32 1, %s74
  $region52: #{siamese_forward.1} parent=0 // loop_footer_branch
    %73 = sbr.rel target = $region48
  $region53: #{siamese_forward.1} parent=0 // loop_exit
    _
  %v83 = vld [vmem:[#allocation2] sm:$0xff]
  %v84 = vld [vmem:[#allocation2 + $0x8] sm:$0xff]
  %v85 = vld [vmem:[#allocation2 + $0x10] sm:$0xff]
  %v86 = vld [vmem:[#allocation2 + $0x18] sm:$0xff]
  %v87 = vpack.c.bf16 %v84, %v83
  %v88 = vpack.c.bf16 %v86, %v85
  %v89 = vld [vmem:[%s2] sm:$0xf]
  %v90 = vld [vmem:[%s2 + $0x4] sm:$0xf]
  %v91 = vld [vmem:[%s2 + $0x8] sm:$0xf]
  %v92 = vld [vmem:[%s2 + $0xc] sm:$0xf]
  %v93 = vld [vmem:[%s3] sm:$0x1]
  %v95 = vlaneseq
  %v96 = vshrl.u32 %v95, 7
  %v97 = vsub.s32 0, %v96
  %v98 = vrot.slane %v93, %v97
  %v104 = vunpack.c.l.b16 %v89
  %v105 = vunpack.c.l.b16 %v90
  %v106 = vunpack.c.l.b16 %v91
  %v107 = vunpack.c.l.b16 %v92
  %v108 = vpack.c.b16 %v105, %v104
  %v109 = vpack.c.b16 %v107, %v106
  %vm112 = vcmask 261120
  %v114 = vsel %vm112, %v87, 0
  %v117 = vsel %vm112, %v88, 0
  %119 = vmatprep.subr.bf16.mxu0 0
  %120 = vmatpush1.bf16.msra.mxu0 %v108
  %121 = vmatprep.subr.bf16.mxu0 0
  %122 = vmatpush1.bf16.msra.mxu0 %v109
  %123 = vmatprep.subr.bf16.mxu0 0
  %124 = vmatpush1.bf16.msra.mxu0 0
  %125 = vmatprep.subr.bf16.mxu0 0
  %126 = vmatpush1.bf16.msra.mxu0 0
  %127 = vmatprep.subr.bf16.mxu0 0
  %128 = vmatpush1.bf16.msra.mxu0 0
  %129 = vmatprep.subr.bf16.mxu0 0
  %130 = vmatpush1.bf16.msra.mxu0 0
  %131 = vmatprep.subr.bf16.mxu0 0
  %132 = vmatpush1.bf16.msra.mxu0 0
  %133 = vmatprep.subr.bf16.mxu0 0
  %134 = vmatpush1.bf16.msra.mxu0 0
  %135 = vmatprep.subr.bf16.mxu0 0
  %136 = vmatpush1.bf16.msra.mxu0 0
  %137 = vmatprep.subr.bf16.mxu0 0
  %138 = vmatpush1.bf16.msra.mxu0 0
  %139 = vmatprep.subr.bf16.mxu0 0
  %140 = vmatpush1.bf16.msra.mxu0 0
  %141 = vmatprep.subr.bf16.mxu0 0
  %142 = vmatpush1.bf16.msra.mxu0 0
  %143 = vmatprep.subr.bf16.mxu0 0
  %144 = vmatpush1.bf16.msra.mxu0 0
  %145 = vmatprep.subr.bf16.mxu0 0
  %146 = vmatpush1.bf16.msra.mxu0 0
  %147 = vmatprep.subr.bf16.mxu0 0
  %148 = vmatpush1.bf16.msra.mxu0 0
  %149 = vmatprep.subr.bf16.mxu0 0
  %150 = vmatpush1.bf16.msra.mxu0 0
  %151 = vmatprep.mubr.bf16.mxu0 0
  %152 = vmatmul.mubr.bf16.gmra.mrb[0].mxu0 %v114
  %v153 = vpop.f32.mrb[0].mxu0
  %v154 = vadd.f32 %v98, %v153
  %v155 = vpop.f32.mrb[0].mxu0
  %v156 = vpop.f32.mrb[0].mxu0
  %v157 = vadd.f32 %v98, %v156
  %v158 = vpop.f32.mrb[0].mxu0
  %159 = vmatprep.mubr.bf16.mxu0 0
  %160 = vmatmul.mubr.bf16.gmra.mrb[0].mxu0 %v117
  %v161 = vpop.f32.mrb[0].mxu0
  %v162 = vadd.f32 %v98, %v161
  %v163 = vpop.f32.mrb[0].mxu0
  %v164 = vpop.f32.mrb[0].mxu0
  %v165 = vadd.f32 %v98, %v164
  %v166 = vpop.f32.mrb[0].mxu0
  %167 = vdwg.mxu0
  %v168 = vtanh.pop %v154
  %v169 = vtanh.pop %v157
  %v170 = vtanh.pop %v162
  %v171 = vtanh.pop %v165
  %v172 = vsel %vm112, %v168, 0.0
  %v173 = vrot.slane %v172, 4
  %v174 = vadd.f32 %v172, %v173
  %v175 = vrot.slane %v174, 2
  %v176 = vadd.f32 %v174, %v175
  %v177 = vrot.slane %v176, 1
  %v178 = vadd.f32 %v176, %v177
  %v179 = vsel %vm112, %v169, 0.0
  %v180 = vrot.slane %v179, 4
  %v181 = vadd.f32 %v179, %v180
  %v182 = vrot.slane %v181, 2
  %v183 = vadd.f32 %v181, %v182
  %v184 = vrot.slane %v183, 1
  %v185 = vadd.f32 %v183, %v184
  %v186 = vsel %vm112, %v170, 0.0
  %v187 = vrot.slane %v186, 4
  %v188 = vadd.f32 %v186, %v187
  %v189 = vrot.slane %v188, 2
  %v190 = vadd.f32 %v188, %v189
  %v191 = vrot.slane %v190, 1
  %v192 = vadd.f32 %v190, %v191
  %v193 = vsel %vm112, %v171, 0.0
  %v194 = vrot.slane %v193, 4
  %v195 = vadd.f32 %v193, %v194
  %v196 = vrot.slane %v195, 2
  %v197 = vadd.f32 %v195, %v196
  %v198 = vrot.slane %v197, 1
  %v199 = vadd.f32 %v197, %v198
  %v200 = vmul.f32 %v178, 0.125
  %v201 = vmul.f32 %v185, 0.125
  %v202 = vmul.f32 %v192, 0.125
  %v203 = vmul.f32 %v199, 0.125
  %vm208 = vcmask 1041409
  %v209 = vsel %vm208, %v201, %v200
  %vm210 = vcmask 1042434
  %v211 = vsel %vm210, %v202, %v209
  %vm212 = vcmask 1043459
  %v213 = vsel %vm212, %v203, %v211
  %vm215 = vcmask 257024
  %216 = vst.msk [vmem:[%s4] sm:$0xf] %vm215, %v213
  // Predicated region
  $region54: #{siamese_forward.1} parent=0 // pred_check
    _
  $region55: #{siamese_forward.1} parent=0 // pred_check_branch
    %218 = sbr.rel (0) target = $region57
  $region56: #{siamese_forward.1} parent=0 // pred_region
    _
  $region57: #{siamese_forward.1} parent=0 // pred_fallthru
    _
  // Predicated region
  $region58: #{siamese_forward.1} parent=0 // pred_check
    _
  $region59: #{siamese_forward.1} parent=0 // pred_check_branch
    %220 = sbr.rel (0) target = $region61
  $region60: #{siamese_forward.1} parent=0 // pred_region
    _
  $region61: #{siamese_forward.1} parent=0 // pred_fallthru
    _
  %221 = vsyncmov [#allocation3]
  %s222 = vpop.sfrf %221
  %p223 = scmp.eq.s32.totalorder %s222, 0
  %p224 = pneg %p223
  %226 = shalt.err (%p224)

</llo_original>
